<compile_context>
chip_gen: v7x
topology: tpu7x:2x2x1
jax: 0.10.0
libtpu: 0.0.40
codegen_flags: <defaults>
</compile_context>

<pallas_src>
import functools

import jax
import jax.numpy as jnp
from jax.experimental import pallas as pl
from jax.experimental.pallas import tpu as pltpu

STATE_DIM = 32 * 5          # 160
ACTION_DIM = 4 * 32         # 128
HIDDEN = 64                 # logical hidden width (matches the PyTorch module)
HIDDEN_PAD = 128            # lane-dense padded hidden width used in storage
MAX_BATCH_TILE = 2048       # large M tile: fills MXU rows, amortizes ~0.35us/step
PARAM_DTYPE = jnp.bfloat16  # weight storage dtype (f32 accumulation in-kernel)


def _round_up(x, m):
    return (x + m - 1) // m * m


def _mlp_kernel(s_ref, w1_ref, wh_ref, b_ref, o_ref):
    """Fused 4-layer MLP on one (tile, 160) batch block.

    s_ref : (tile, 160)   any float dtype (cast to weight dtype for the MXU)
    w1_ref: (160, 128)    bf16
    wh_ref: (3, 128, 128) bf16   -- layers 2, 3, 4
    b_ref : (8, 128)      f32    -- rows 0..3 = b1..b4, rows 4..7 unused (zero)
    o_ref : (tile, 128)
    """
    wdt = w1_ref.dtype
    b = b_ref[...]                       # one f32 vreg tile, loaded once

    x = s_ref[...].astype(wdt)
    # layer 1: (tile,160) @ (160,128) -> f32, + bias, ReLU
    h = jnp.dot(x, w1_ref[...], preferred_element_type=jnp.float32) + b[0:1, :]
    h = jnp.maximum(h, 0.0)
    # layer 2: (tile,128) @ (128,128)
    h = jnp.dot(h.astype(wdt), wh_ref[0],
                preferred_element_type=jnp.float32) + b[1:2, :]
    h = jnp.maximum(h, 0.0)
    # layer 3: (tile,128) @ (128,128)
    h = jnp.dot(h.astype(wdt), wh_ref[1],
                preferred_element_type=jnp.float32) + b[2:3, :]
    h = jnp.maximum(h, 0.0)
    # layer 4 (output head): (tile,128) @ (128,128)
    o_ref[...] = (jnp.dot(h.astype(wdt), wh_ref[2],
                          preferred_element_type=jnp.float32)
                  + b[3:4, :]).astype(o_ref.dtype)


@functools.partial(jax.jit, static_argnames=("out_dtype",))
def qnetwork_forward(s, params, out_dtype=jnp.float32):
    """s: (B, 160) float32/bfloat16 -> (B, 128) q-values in `out_dtype`."""
    w1, wh, b = params
    B = s.shape[0]
    if B == 0:
        return jnp.zeros((0, ACTION_DIM), out_dtype)

    # --- tile / grid selection ------------------------------------------------
    nt = pl.cdiv(B, MAX_BATCH_TILE)          # minimum #tiles to respect the cap
    if B >= 256:
        nt = max(nt, 2)                      # v7x: >= 1 tile per TensorCore
    tile = _round_up(pl.cdiv(B, nt), 8)      # sublane-aligned per-tile rows
    if tile >= B:
        tile = B                             # single block == full array (no pad)
    grid = (pl.cdiv(B, tile),)               # ragged last tile masked by Pallas

    act_in = pl.BlockSpec((tile, STATE_DIM), lambda i: (i, 0))
    act_out = pl.BlockSpec((tile, ACTION_DIM), lambda i: (i, 0))
    # Constant block index => parameters DMA'd once, stay VMEM-resident.
    w1_spec = pl.BlockSpec(w1.shape, lambda i: (0, 0))
    wh_spec = pl.BlockSpec(wh.shape, lambda i: (0, 0, 0))
    b_spec = pl.BlockSpec(b.shape, lambda i: (0, 0))

    return pl.pallas_call(
        _mlp_kernel,
        out_shape=jax.ShapeDtypeStruct((B, ACTION_DIM), out_dtype),
        grid_spec=pl.GridSpec(
            grid=grid,
            in_specs=[act_in, w1_spec, wh_spec, b_spec],
            out_specs=act_out,
        ),
        compiler_params=pltpu.CompilerParams(
            dimension_semantics=("parallel",),   # shard batch tiles across TCs
            vmem_limit_bytes=32 * 1024 * 1024,   # ample headroom (usage << 32MB)
        ),
    )(s, w1, wh, b)


def init_params(key, param_dtype=PARAM_DTYPE):
    """PyTorch-style init U(-1/sqrt(fan_in), 1/sqrt(fan_in)) at the LOGICAL
    dims, then zero-padded to lane-dense 128-wide hidden storage and packed:

      w1 : (160, 128)    param_dtype
      wh : (3, 128, 128) param_dtype   (layers 2, 3, 4 stacked)
      b  : (8, 128)      float32       (rows 0..3 = b1..b4, rows 4..7 zero)

    Padded weight columns/rows and padded bias lanes are exactly zero, so the
    padded network is numerically identical to the 64-wide original.
    """
    logical = [(STATE_DIM, HIDDEN), (HIDDEN, HIDDEN),
               (HIDDEN, HIDDEN), (HIDDEN, ACTION_DIM)]
    ws = []
    b_pack = jnp.zeros((8, HIDDEN_PAD), jnp.float32)
    for layer, (fi, fo) in enumerate(logical):
        key, kw, kb = jax.random.split(key, 3)
        bound = 1.0 / (fi ** 0.5)
        w = jax.random.uniform(kw, (fi, fo), jnp.float32,
                               minval=-bound, maxval=bound)
        bias = jax.random.uniform(kb, (fo,), jnp.float32,
                                  minval=-bound, maxval=bound)
        pi = STATE_DIM if layer == 0 else HIDDEN_PAD
        po = HIDDEN_PAD  # ACTION_DIM == 128 == HIDDEN_PAD for the last layer
        w_pad = jnp.zeros((pi, po), jnp.float32).at[:fi, :fo].set(w)
        ws.append(w_pad.astype(param_dtype))
        b_pack = b_pack.at[layer, :fo].set(bias)
    w1 = ws[0]
    wh = jnp.stack(ws[1:], axis=0)   # (3, 128, 128)
    return (w1, wh, b_pack)


def _reference_forward(s, params):
    """Pure-JAX reference doing the identical math (bf16 matmul, f32 acc)."""
    w1, wh, b = params
    wdt = w1.dtype
    h = jnp.dot(s.astype(wdt), w1, preferred_element_type=jnp.float32) + b[0:1]
    h = jnp.maximum(h, 0.0)
    for l in range(3):
        h = jnp.dot(h.astype(wdt), wh[l],
                    preferred_element_type=jnp.float32) + b[l + 1:l + 2]
        if l < 2:
            h = jnp.maximum(h, 0.0)
    return h


# TODO(synk): nn.MSELoss (compute_loss) is a trivial reduction; left to plain
# JAX outside the kernel rather than faking a Pallas version.


if __name__ == "__main__":
    key = jax.random.PRNGKey(0)
    key, k_s1, k_s2 = jax.random.split(key, 3)
    params = init_params(key)

    # Small batch: tile == full batch, single grid step, no padding at all.
    B1 = 4
    s1 = jax.random.normal(k_s1, (B1, STATE_DIM), jnp.float32)
    q1 = qnetwork_forward(s1, params)
    jax.block_until_ready(q1)
    q1_ref = _reference_forward(s1, params)
    assert q1.shape == (B1, ACTION_DIM) and q1.dtype == jnp.float32
    assert jnp.allclose(q1, q1_ref, atol=5e-3, rtol=5e-3), "mismatch (B=4)"

    # Batch >= 256: two parallel tiles (one per v7x TC) with a ragged last tile
    # (260 = 136 + 124), exercising Pallas boundary-block masking.
    B2 = 260
    s2 = jax.random.normal(k_s2, (B2, STATE_DIM), jnp.float32)
    q2 = qnetwork_forward(s2, params)
    jax.block_until_ready(q2)
    q2_ref = _reference_forward(s2, params)
    assert q2.shape == (B2, ACTION_DIM) and q2.dtype == jnp.float32
    assert jnp.allclose(q2, q2_ref, atol=5e-3, rtol=5e-3), "mismatch (B=260)"

    print("KERNEL_OK")
</pallas_src>

<mosaic_0001>
module attributes {stable_mosaic.version = 11 : i64} {
  func.func @_mlp_kernel(%arg0: i32, %arg1: memref<4x160xf32, #tpu.memory_space<vmem>>, %arg2: memref<160x128xbf16, #tpu.memory_space<vmem>>, %arg3: memref<3x128x128xbf16, #tpu.memory_space<vmem>>, %arg4: memref<8x128xf32, #tpu.memory_space<vmem>>, %arg5: memref<4x128xf32, #tpu.memory_space<vmem>>) attributes {dimension_semantics = [#tpu.dimension_semantics<parallel>], iteration_bounds = array<i64: 1>, scalar_prefetch = 0 : i64, scratch_operands = 0 : i64, tpu.core_type = #tpu.core_type<tc>, window_params = [{transform_indices = @transform_0, window_bounds = array<i64: 4, 160>}, {pipeline_mode = #tpu.pipeline_mode<synchronous>, transform_indices = @transform_1, window_bounds = array<i64: 160, 128>}, {pipeline_mode = #tpu.pipeline_mode<synchronous>, transform_indices = @transform_2, window_bounds = array<i64: 3, 128, 128>}, {pipeline_mode = #tpu.pipeline_mode<synchronous>, transform_indices = @transform_3, window_bounds = array<i64: 8, 128>}, {transform_indices = @transform_4, window_bounds = array<i64: 4, 128>}]} {
    %c0 = arith.constant 0 : index
    %c0_0 = arith.constant 0 : index
    %0 = vector.load %arg4[%c0, %c0_0] : memref<8x128xf32, #tpu.memory_space<vmem>>, vector<8x128xf32>
    %c0_1 = arith.constant 0 : index
    %c0_2 = arith.constant 0 : index
    %1 = vector.load %arg1[%c0_1, %c0_2] : memref<4x160xf32, #tpu.memory_space<vmem>>, vector<4x160xf32>
    %2 = arith.truncf %1 : vector<4x160xf32> to vector<4x160xbf16>
    %c0_3 = arith.constant 0 : index
    %c0_4 = arith.constant 0 : index
    %3 = vector.load %arg2[%c0_3, %c0_4] : memref<160x128xbf16, #tpu.memory_space<vmem>>, vector<160x128xbf16>
    %cst = arith.constant dense<0.000000e+00> : vector<4x128xf32>
    %4 = tpu.matmul %2, %3, %cst {dimension_numbers = #tpu.dot_dimension_numbers<[1], [0], [0], [1], [0, 0, 1, 1], [], []>} : vector<4x160xbf16>, vector<160x128xbf16>, vector<4x128xf32> -> vector<4x128xf32>
    %5 = vector.extract_strided_slice %0 {offsets = [0, 0], sizes = [1, 128], strides = [1, 1]} : vector<8x128xf32> to vector<1x128xf32>
    %6 = vector.broadcast %5 : vector<1x128xf32> to vector<4x128xf32>
    %7 = arith.addf %4, %6 : vector<4x128xf32>
    %cst_5 = arith.constant 0.000000e+00 : f32
    %8 = vector.broadcast %cst_5 : f32 to vector<4x128xf32>
    %9 = arith.maximumf %7, %8 : vector<4x128xf32>
    %10 = arith.truncf %9 : vector<4x128xf32> to vector<4x128xbf16>
    %c0_6 = arith.constant 0 : index
    %c0_7 = arith.constant 0 : index
    %c0_8 = arith.constant 0 : index
    %11 = vector.load %arg3[%c0_6, %c0_7, %c0_8] : memref<3x128x128xbf16, #tpu.memory_space<vmem>>, vector<1x128x128xbf16>
    %12 = vector.shape_cast %11 : vector<1x128x128xbf16> to vector<128x128xbf16>
    %cst_9 = arith.constant dense<0.000000e+00> : vector<4x128xf32>
    %13 = tpu.matmul %10, %12, %cst_9 {dimension_numbers = #tpu.dot_dimension_numbers<[1], [0], [0], [1], [0, 0, 1, 1], [], []>} : vector<4x128xbf16>, vector<128x128xbf16>, vector<4x128xf32> -> vector<4x128xf32>
    %14 = vector.extract_strided_slice %0 {offsets = [1, 0], sizes = [1, 128], strides = [1, 1]} : vector<8x128xf32> to vector<1x128xf32>
    %15 = vector.broadcast %14 : vector<1x128xf32> to vector<4x128xf32>
    %16 = arith.addf %13, %15 : vector<4x128xf32>
    %cst_10 = arith.constant 0.000000e+00 : f32
    %17 = vector.broadcast %cst_10 : f32 to vector<4x128xf32>
    %18 = arith.maximumf %16, %17 : vector<4x128xf32>
    %19 = arith.truncf %18 : vector<4x128xf32> to vector<4x128xbf16>
    %c1 = arith.constant 1 : index
    %c0_11 = arith.constant 0 : index
    %c0_12 = arith.constant 0 : index
    %20 = vector.load %arg3[%c1, %c0_11, %c0_12] : memref<3x128x128xbf16, #tpu.memory_space<vmem>>, vector<1x128x128xbf16>
    %21 = vector.shape_cast %20 : vector<1x128x128xbf16> to vector<128x128xbf16>
    %cst_13 = arith.constant dense<0.000000e+00> : vector<4x128xf32>
    %22 = tpu.matmul %19, %21, %cst_13 {dimension_numbers = #tpu.dot_dimension_numbers<[1], [0], [0], [1], [0, 0, 1, 1], [], []>} : vector<4x128xbf16>, vector<128x128xbf16>, vector<4x128xf32> -> vector<4x128xf32>
    %23 = vector.extract_strided_slice %0 {offsets = [2, 0], sizes = [1, 128], strides = [1, 1]} : vector<8x128xf32> to vector<1x128xf32>
    %24 = vector.broadcast %23 : vector<1x128xf32> to vector<4x128xf32>
    %25 = arith.addf %22, %24 : vector<4x128xf32>
    %cst_14 = arith.constant 0.000000e+00 : f32
    %26 = vector.broadcast %cst_14 : f32 to vector<4x128xf32>
    %27 = arith.maximumf %25, %26 : vector<4x128xf32>
    %28 = arith.truncf %27 : vector<4x128xf32> to vector<4x128xbf16>
    %c2 = arith.constant 2 : index
    %c0_15 = arith.constant 0 : index
    %c0_16 = arith.constant 0 : index
    %29 = vector.load %arg3[%c2, %c0_15, %c0_16] : memref<3x128x128xbf16, #tpu.memory_space<vmem>>, vector<1x128x128xbf16>
    %30 = vector.shape_cast %29 : vector<1x128x128xbf16> to vector<128x128xbf16>
    %cst_17 = arith.constant dense<0.000000e+00> : vector<4x128xf32>
    %31 = tpu.matmul %28, %30, %cst_17 {dimension_numbers = #tpu.dot_dimension_numbers<[1], [0], [0], [1], [0, 0, 1, 1], [], []>} : vector<4x128xbf16>, vector<128x128xbf16>, vector<4x128xf32> -> vector<4x128xf32>
    %32 = vector.extract_strided_slice %0 {offsets = [3, 0], sizes = [1, 128], strides = [1, 1]} : vector<8x128xf32> to vector<1x128xf32>
    %33 = vector.broadcast %32 : vector<1x128xf32> to vector<4x128xf32>
    %34 = arith.addf %31, %33 : vector<4x128xf32>
    %c0_18 = arith.constant 0 : index
    %c0_19 = arith.constant 0 : index
    %35 = vector.load %arg5[%c0_18, %c0_19] : memref<4x128xf32, #tpu.memory_space<vmem>>, vector<4x128xf32>
    tpu.vector_store %arg5[%c0_18, %c0_19], %34 {strides = array<i32>} : memref<4x128xf32, #tpu.memory_space<vmem>>, vector<4x128xf32>,
    return
  }
  func.func @transform_0(%arg0: i32) -> (i32, i32) {
    %c0_i32 = arith.constant 0 : i32
    %c0_i32_0 = arith.constant 0 : i32
    return %arg0, %c0_i32 : i32, i32
  }
  func.func @transform_1(%arg0: i32) -> (i32, i32) {
    %c0_i32 = arith.constant 0 : i32
    %c0_i32_0 = arith.constant 0 : i32
    %c0_i32_1 = arith.constant 0 : i32
    return %c0_i32, %c0_i32_0 : i32, i32
  }
  func.func @transform_2(%arg0: i32) -> (i32, i32, i32) {
    %c0_i32 = arith.constant 0 : i32
    %c0_i32_0 = arith.constant 0 : i32
    %c0_i32_1 = arith.constant 0 : i32
    %c0_i32_2 = arith.constant 0 : i32
    return %c0_i32, %c0_i32_0, %c0_i32_1 : i32, i32, i32
  }
  func.func @transform_3(%arg0: i32) -> (i32, i32) {
    %c0_i32 = arith.constant 0 : i32
    %c0_i32_0 = arith.constant 0 : i32
    %c0_i32_1 = arith.constant 0 : i32
    return %c0_i32, %c0_i32_0 : i32, i32
  }
  func.func @transform_4(%arg0: i32) -> (i32, i32) {
    %c0_i32 = arith.constant 0 : i32
    %c0_i32_0 = arith.constant 0 : i32
    return %arg0, %c0_i32 : i32, i32
  }
}

</mosaic_0001>

<llo_original>
// kernel: qnetwork_forward.1
$region0: #{qnetwork_forward.1}
  #allocation0 [shape = 'u32[]', space=smem, size = 0x4, offset = 0x4, fixed_abs, tag = 'smem constant byte address 0x4 - core index']
  #allocation1 [shape = 'u32[144,128]{1,0:T(1,128)}', space=vmem, size = 0x12000, scoped, tag = 'internal scratch']
  %s0 = inlined_call_operand.hbm [shape: f32[4,160], index: 0, kind: input, shape index: {}]
  %s1 = inlined_call_operand.hbm [shape: bf16[160,128], index: 1, kind: input, shape index: {}]
  %s2 = inlined_call_operand.hbm [shape: bf16[3,128,128], index: 2, kind: input, shape index: {}]
  %s3 = inlined_call_operand.vmem [shape: f32[8,128], index: 3, kind: input, shape index: {}]
  %s4 = inlined_call_operand.hbm [shape: f32[4,128], index: 4, kind: output, shape index: {}]
  %s5 = sld [smem:[#allocation0]]
  $region38: #{qnetwork_forward.1} parent=0
    _
  %s7 = ssub.s32 1, %s5
  %s8 = scalar_select 0, %s7, %s5
  $region1: #{qnetwork_forward.1} parent=0
    #allocation2 [shape = 'u8[4096]{0}', space=vmem, size = 0x1000, scoped, tag = 'input window, operand 0, single buffered']
    #allocation3 [shape = 's32[1]{0}', space=sflag, size = 0x4, scoped, tag = 'scoped memory for qnetwork_forward.1']
    #allocation4 [shape = 's32[1]{0}', space=sflag, size = 0x4, scoped, tag = 'scoped memory for qnetwork_forward.1']
    #allocation5 [shape = 'u8[40960]{0}', space=vmem, size = 0xa000, scoped, tag = 'input window, operand 1, single buffered']
    #allocation6 [shape = 's32[1]{0}', space=sflag, size = 0x4, scoped, tag = 'scoped memory for qnetwork_forward.1']
    #allocation7 [shape = 'u8[98304]{0}', space=vmem, size = 0x18000, scoped, tag = 'input window, operand 2, single buffered']
    #allocation8 [shape = 'u8[2048]{0}', space=vmem, size = 0x800, scoped, tag = 'output window, operand 0, single buffered']
    %9 = vsyncpa [#allocation3], 0
    %10 = vsyncpa [#allocation6], 0
    %11 = vsyncpa [#allocation4], 0
    // Predicated region
    $region2: #{qnetwork_forward.1} parent=1 // pred_check
      _
    $region3: #{qnetwork_forward.1} parent=1 // pred_check_branch
      %13 = sbr.rel (0) target = $region5
    $region4: #{qnetwork_forward.1} parent=1 // pred_region
      %s15 = ssub.s32 128, 128
      %16 = vsyncadd [#allocation3], %s15
      %s18 = sshll.u32 [#allocation2], 4
      %s19 = int_to_ptr.vmem [resolvable:$true] %s18
      %21 = dma.hbm_to_vmem [thread:$0]  %s0, 128, %s19, [#allocation3]
    $region5: #{qnetwork_forward.1} parent=1 // pred_fallthru
      _
    // Predicated region
    $region6: #{qnetwork_forward.1} parent=1 // pred_check
      _
    $region7: #{qnetwork_forward.1} parent=1 // pred_check_branch
      %23 = sbr.rel (0) target = $region9
    $region8: #{qnetwork_forward.1} parent=1 // pred_region
      %s25 = ssub.s32 1280, 1280
      %26 = vsyncadd [#allocation6], %s25
      %s27 = sshll.u32 [#allocation5], 4
      %s28 = int_to_ptr.vmem [resolvable:$true] %s27
      %33 = dma.hbm_to_vmem [thread:$0]  %s1, 1280, %s28, [#allocation6], 64, 64, 4
    $region9: #{qnetwork_forward.1} parent=1 // pred_fallthru
      _
    // Predicated region
    $region10: #{qnetwork_forward.1} parent=1 // pred_check
      _
    $region11: #{qnetwork_forward.1} parent=1 // pred_check_branch
      %35 = sbr.rel (0) target = $region13
    $region12: #{qnetwork_forward.1} parent=1 // pred_region
      %s37 = ssub.s32 3072, 3072
      %38 = vsyncadd [#allocation6], %s37
      %s39 = sshll.u32 [#allocation7], 4
      %s40 = int_to_ptr.vmem [resolvable:$true] %s39
      %45 = dma.hbm_to_vmem [thread:$0]  %s2, 3072, %s40, [#allocation6], 64, 64, 4
    $region13: #{qnetwork_forward.1} parent=1 // pred_fallthru
      _
    // Predicated region
    $region14: #{qnetwork_forward.1} parent=1 // pred_check
      _
    $region15: #{qnetwork_forward.1} parent=1 // pred_check_branch
      %47 = sbr.rel (0) target = $region17
    $region16: #{qnetwork_forward.1} parent=1 // pred_region
      _
    $region17: #{qnetwork_forward.1} parent=1 // pred_fallthru
      _
    // Predicated region
    $region18: #{qnetwork_forward.1} parent=1 // pred_check
      _
    $region19: #{qnetwork_forward.1} parent=1 // pred_check_branch
      %49 = sbr.rel (0) target = $region21
    $region20: #{qnetwork_forward.1} parent=1 // pred_region
      %50 = dma.done [#allocation3], 128
    $region21: #{qnetwork_forward.1} parent=1 // pred_fallthru
      _
    // Predicated region
    $region22: #{qnetwork_forward.1} parent=1 // pred_check
      _
    $region23: #{qnetwork_forward.1} parent=1 // pred_check_branch
      %52 = sbr.rel (0) target = $region25
    $region24: #{qnetwork_forward.1} parent=1 // pred_region
      %53 = dma.done [#allocation6], 1280
    $region25: #{qnetwork_forward.1} parent=1 // pred_fallthru
      _
    // Predicated region
    $region26: #{qnetwork_forward.1} parent=1 // pred_check
      _
    $region27: #{qnetwork_forward.1} parent=1 // pred_check_branch
      %55 = sbr.rel (0) target = $region29
    $region28: #{qnetwork_forward.1} parent=1 // pred_region
      %56 = dma.done [#allocation6], 3072
    $region29: #{qnetwork_forward.1} parent=1 // pred_fallthru
      _
    %v58 = vld [vmem:[%s3] sm:$0xff]
    %v59 = vld [vmem:[#allocation2] sm:$0xff]
    %v61 = vcombine.high %v59, %v59
    %v63 = vpack.c.bf16 %v59, %v59
    %v64 = vpack.c.bf16 %v61, %v61
    %v65 = vld [vmem:[#allocation5] sm:$0xf]
    %v66 = vld [vmem:[#allocation5 + $0x4] sm:$0xf]
    %v67 = vld [vmem:[#allocation5 + $0x8] sm:$0xf]
    %v68 = vld [vmem:[#allocation5 + $0xc] sm:$0xf]
    %v69 = vld [vmem:[#allocation5 + $0x10] sm:$0xf]
    %v70 = vld [vmem:[#allocation5 + $0x14] sm:$0xf]
    %v71 = vld [vmem:[#allocation5 + $0x18] sm:$0xf]
    %v72 = vld [vmem:[#allocation5 + $0x1c] sm:$0xf]
    %v73 = vld [vmem:[#allocation5 + $0x20] sm:$0xf]
    %v74 = vld [vmem:[#allocation5 + $0x24] sm:$0xf]
    %v75 = vld [vmem:[#allocation5 + $0x28] sm:$0xf]
    %v76 = vld [vmem:[#allocation5 + $0x2c] sm:$0xf]
    %v77 = vld [vmem:[#allocation5 + $0x30] sm:$0xf]
    %v78 = vld [vmem:[#allocation5 + $0x34] sm:$0xf]
    %v79 = vld [vmem:[#allocation5 + $0x38] sm:$0xf]
    %v80 = vld [vmem:[#allocation5 + $0x3c] sm:$0xf]
    %v81 = vld [vmem:[#allocation5 + $0x40] sm:$0xf]
    %v82 = vld [vmem:[#allocation5 + $0x44] sm:$0xf]
    %v83 = vld [vmem:[#allocation5 + $0x48] sm:$0xf]
    %v84 = vld [vmem:[#allocation5 + $0x4c] sm:$0xf]
    %v85 = vlaneseq
    %v86 = vshrl.u32 %v85, 7
    %v87 = vsub.s32 0, %v86
    %v88 = vrot.slane %v58, %v87
    %v109 = vunpack.c.l.b16 %v65
    %v110 = vunpack.c.l.b16 %v66
    %v111 = vunpack.c.l.b16 %v67
    %v112 = vunpack.c.l.b16 %v68
    %v113 = vunpack.c.l.b16 %v69
    %v114 = vunpack.c.l.b16 %v70
    %v115 = vunpack.c.l.b16 %v71
    %v116 = vunpack.c.l.b16 %v72
    %v117 = vunpack.c.l.b16 %v73
    %v118 = vunpack.c.l.b16 %v74
    %v119 = vunpack.c.l.b16 %v75
    %v120 = vunpack.c.l.b16 %v76
    %v121 = vunpack.c.l.b16 %v77
    %v122 = vunpack.c.l.b16 %v78
    %v123 = vunpack.c.l.b16 %v79
    %v124 = vunpack.c.l.b16 %v80
    %v125 = vunpack.c.l.b16 %v81
    %v126 = vunpack.c.l.b16 %v82
    %v127 = vunpack.c.l.b16 %v83
    %v128 = vunpack.c.l.b16 %v84
    %v129 = vpack.c.b16 %v110, %v109
    %v130 = vpack.c.b16 %v112, %v111
    %v131 = vpack.c.b16 %v114, %v113
    %v132 = vpack.c.b16 %v116, %v115
    %v133 = vpack.c.b16 %v118, %v117
    %v134 = vpack.c.b16 %v120, %v119
    %v135 = vpack.c.b16 %v122, %v121
    %v136 = vpack.c.b16 %v124, %v123
    %v137 = vpack.c.b16 %v126, %v125
    %v138 = vpack.c.b16 %v128, %v127
    %vm149 = vcmask 261120
    %v151 = vsel %vm149, %v64, 0
    %153 = vmatprep.subr.bf16.mxu0 0
    %154 = vmatpush1.bf16.msra.mxu0 %v129
    %155 = vmatprep.subr.bf16.mxu0 0
    %156 = vmatpush1.bf16.msra.mxu0 %v130
    %157 = vmatprep.subr.bf16.mxu0 0
    %158 = vmatpush1.bf16.msra.mxu0 %v131
    %159 = vmatprep.subr.bf16.mxu0 0
    %160 = vmatpush1.bf16.msra.mxu0 %v132
    %161 = vmatprep.subr.bf16.mxu0 0
    %162 = vmatpush1.bf16.msra.mxu0 %v133
    %163 = vmatprep.subr.bf16.mxu0 0
    %164 = vmatpush1.bf16.msra.mxu0 %v134
    %165 = vmatprep.subr.bf16.mxu0 0
    %166 = vmatpush1.bf16.msra.mxu0 %v135
    %167 = vmatprep.subr.bf16.mxu0 0
    %168 = vmatpush1.bf16.msra.mxu0 %v136
    %169 = vmatprep.subr.bf16.mxu0 0
    %170 = vmatpush1.bf16.msra.mxu0 %v137
    %171 = vmatprep.subr.bf16.mxu0 0
    %172 = vmatpush1.bf16.msra.mxu0 %v138
    %173 = vmatprep.subr.bf16.mxu0 0
    %174 = vmatpush1.bf16.msra.mxu0 0
    %175 = vmatprep.subr.bf16.mxu0 0
    %176 = vmatpush1.bf16.msra.mxu0 0
    %177 = vmatprep.subr.bf16.mxu0 0
    %178 = vmatpush1.bf16.msra.mxu0 0
    %179 = vmatprep.subr.bf16.mxu0 0
    %180 = vmatpush1.bf16.msra.mxu0 0
    %181 = vmatprep.subr.bf16.mxu0 0
    %182 = vmatpush1.bf16.msra.mxu0 0
    %183 = vmatprep.subr.bf16.mxu0 0
    %184 = vmatpush1.bf16.msra.mxu0 0
    %185 = vmatprep.mubr.bf16.mxu0 %v151
    %186 = vmatmul.mubr.bf16.gmra.mrb[0].mxu0 %v63
    %v187 = vpop.f32.mrb[0].mxu0
    %v188 = vadd.f32 %v88, %v187
    %v189 = vpop.f32.mrb[0].mxu0
    %v190 = vpop.f32.mrb[0].mxu0
    %v191 = vpop.f32.mrb[0].mxu0
    %192 = vdwg.mxu0
    %v193 = vmax.f32 %v188, 0.0
    %v194 = vpack.c.bf16 %v193, %v193
    %v195 = vld [vmem:[#allocation7] sm:$0xf]
    %v196 = vld [vmem:[#allocation7 + $0x4] sm:$0xf]
    %v197 = vld [vmem:[#allocation7 + $0x8] sm:$0xf]
    %v198 = vld [vmem:[#allocation7 + $0xc] sm:$0xf]
    %v199 = vld [vmem:[#allocation7 + $0x10] sm:$0xf]
    %v200 = vld [vmem:[#allocation7 + $0x14] sm:$0xf]
    %v201 = vld [vmem:[#allocation7 + $0x18] sm:$0xf]
    %v202 = vld [vmem:[#allocation7 + $0x1c] sm:$0xf]
    %v203 = vld [vmem:[#allocation7 + $0x20] sm:$0xf]
    %v204 = vld [vmem:[#allocation7 + $0x24] sm:$0xf]
    %v205 = vld [vmem:[#allocation7 + $0x28] sm:$0xf]
    %v206 = vld [vmem:[#allocation7 + $0x2c] sm:$0xf]
    %v207 = vld [vmem:[#allocation7 + $0x30] sm:$0xf]
    %v208 = vld [vmem:[#allocation7 + $0x34] sm:$0xf]
    %v209 = vld [vmem:[#allocation7 + $0x38] sm:$0xf]
    %v210 = vld [vmem:[#allocation7 + $0x3c] sm:$0xf]
    %v211 = vlaneseq
    %v212 = vshrl.u32 %v211, 7
    %v213 = vsub.s32 1, %v212
    %v214 = vrot.slane %v58, %v213
    %v231 = vunpack.c.l.b16 %v195
    %v232 = vunpack.c.l.b16 %v196
    %v233 = vunpack.c.l.b16 %v197
    %v234 = vunpack.c.l.b16 %v198
    %v235 = vunpack.c.l.b16 %v199
    %v236 = vunpack.c.l.b16 %v200
    %v237 = vunpack.c.l.b16 %v201
    %v238 = vunpack.c.l.b16 %v202
    %v239 = vunpack.c.l.b16 %v203
    %v240 = vunpack.c.l.b16 %v204
    %v241 = vunpack.c.l.b16 %v205
    %v242 = vunpack.c.l.b16 %v206
    %v243 = vunpack.c.l.b16 %v207
    %v244 = vunpack.c.l.b16 %v208
    %v245 = vunpack.c.l.b16 %v209
    %v246 = vunpack.c.l.b16 %v210
    %v247 = vpack.c.b16 %v232, %v231
    %v248 = vpack.c.b16 %v234, %v233
    %v249 = vpack.c.b16 %v236, %v235
    %v250 = vpack.c.b16 %v238, %v237
    %v251 = vpack.c.b16 %v240, %v239
    %v252 = vpack.c.b16 %v242, %v241
    %v253 = vpack.c.b16 %v244, %v243
    %v254 = vpack.c.b16 %v246, %v245
    %263 = vmatprep.subr.bf16.mxu0 0
    %264 = vmatpush1.bf16.msra.mxu0 %v247
    %265 = vmatprep.subr.bf16.mxu0 0
    %266 = vmatpush1.bf16.msra.mxu0 %v248
    %267 = vmatprep.subr.bf16.mxu0 0
    %268 = vmatpush1.bf16.msra.mxu0 %v249
    %269 = vmatprep.subr.bf16.mxu0 0
    %270 = vmatpush1.bf16.msra.mxu0 %v250
    %271 = vmatprep.subr.bf16.mxu0 0
    %272 = vmatpush1.bf16.msra.mxu0 %v251
    %273 = vmatprep.subr.bf16.mxu0 0
    %274 = vmatpush1.bf16.msra.mxu0 %v252
    %275 = vmatprep.subr.bf16.mxu0 0
    %276 = vmatpush1.bf16.msra.mxu0 %v253
    %277 = vmatprep.subr.bf16.mxu0 0
    %278 = vmatpush1.bf16.msra.mxu0 %v254
    %279 = vmatprep.subr.bf16.mxu0 0
    %280 = vmatpush1.bf16.msra.mxu0 0
    %281 = vmatprep.subr.bf16.mxu0 0
    %282 = vmatpush1.bf16.msra.mxu0 0
    %283 = vmatprep.subr.bf16.mxu0 0
    %284 = vmatpush1.bf16.msra.mxu0 0
    %285 = vmatprep.subr.bf16.mxu0 0
    %286 = vmatpush1.bf16.msra.mxu0 0
    %287 = vmatprep.subr.bf16.mxu0 0
    %288 = vmatpush1.bf16.msra.mxu0 0
    %289 = vmatprep.subr.bf16.mxu0 0
    %290 = vmatpush1.bf16.msra.mxu0 0
    %291 = vmatprep.subr.bf16.mxu0 0
    %292 = vmatpush1.bf16.msra.mxu0 0
    %293 = vmatprep.subr.bf16.mxu0 0
    %294 = vmatpush1.bf16.msra.mxu0 0
    %295 = vmatprep.mubr.bf16.mxu0 0
    %296 = vmatmul.mubr.bf16.gmra.mrb[0].mxu0 %v194
    %v297 = vpop.f32.mrb[0].mxu0
    %v298 = vadd.f32 %v214, %v297
    %v299 = vpop.f32.mrb[0].mxu0
    %v300 = vpop.f32.mrb[0].mxu0
    %v301 = vpop.f32.mrb[0].mxu0
    %302 = vdwg.mxu0
    %v303 = vmax.f32 %v298, 0.0
    %v304 = vpack.c.bf16 %v303, %v303
    %s305 = scalar_lea.vmem [#allocation7], 64
    %v306 = vld [vmem:[%s305] sm:$0xf]
    %v307 = vld [vmem:[%s305 + $0x4] sm:$0xf]
    %v308 = vld [vmem:[%s305 + $0x8] sm:$0xf]
    %v309 = vld [vmem:[%s305 + $0xc] sm:$0xf]
    %v310 = vld [vmem:[%s305 + $0x10] sm:$0xf]
    %v311 = vld [vmem:[%s305 + $0x14] sm:$0xf]
    %v312 = vld [vmem:[%s305 + $0x18] sm:$0xf]
    %v313 = vld [vmem:[%s305 + $0x1c] sm:$0xf]
    %v314 = vld [vmem:[%s305 + $0x20] sm:$0xf]
    %v315 = vld [vmem:[%s305 + $0x24] sm:$0xf]
    %v316 = vld [vmem:[%s305 + $0x28] sm:$0xf]
    %v317 = vld [vmem:[%s305 + $0x2c] sm:$0xf]
    %v318 = vld [vmem:[%s305 + $0x30] sm:$0xf]
    %v319 = vld [vmem:[%s305 + $0x34] sm:$0xf]
    %v320 = vld [vmem:[%s305 + $0x38] sm:$0xf]
    %v321 = vld [vmem:[%s305 + $0x3c] sm:$0xf]
    %v322 = vlaneseq
    %v323 = vshrl.u32 %v322, 7
    %v324 = vsub.s32 2, %v323
    %v325 = vrot.slane %v58, %v324
    %v342 = vunpack.c.l.b16 %v306
    %v343 = vunpack.c.l.b16 %v307
    %v344 = vunpack.c.l.b16 %v308
    %v345 = vunpack.c.l.b16 %v309
    %v346 = vunpack.c.l.b16 %v310
    %v347 = vunpack.c.l.b16 %v311
    %v348 = vunpack.c.l.b16 %v312
    %v349 = vunpack.c.l.b16 %v313
    %v350 = vunpack.c.l.b16 %v314
    %v351 = vunpack.c.l.b16 %v315
    %v352 = vunpack.c.l.b16 %v316
    %v353 = vunpack.c.l.b16 %v317
    %v354 = vunpack.c.l.b16 %v318
    %v355 = vunpack.c.l.b16 %v319
    %v356 = vunpack.c.l.b16 %v320
    %v357 = vunpack.c.l.b16 %v321
    %v358 = vpack.c.b16 %v343, %v342
    %v359 = vpack.c.b16 %v345, %v344
    %v360 = vpack.c.b16 %v347, %v346
    %v361 = vpack.c.b16 %v349, %v348
    %v362 = vpack.c.b16 %v351, %v350
    %v363 = vpack.c.b16 %v353, %v352
    %v364 = vpack.c.b16 %v355, %v354
    %v365 = vpack.c.b16 %v357, %v356
    %374 = vmatprep.subr.bf16.mxu0 0
    %375 = vmatpush1.bf16.msra.mxu0 %v358
    %376 = vmatprep.subr.bf16.mxu0 0
    %377 = vmatpush1.bf16.msra.mxu0 %v359
    %378 = vmatprep.subr.bf16.mxu0 0
    %379 = vmatpush1.bf16.msra.mxu0 %v360
    %380 = vmatprep.subr.bf16.mxu0 0
    %381 = vmatpush1.bf16.msra.mxu0 %v361
    %382 = vmatprep.subr.bf16.mxu0 0
    %383 = vmatpush1.bf16.msra.mxu0 %v362
    %384 = vmatprep.subr.bf16.mxu0 0
    %385 = vmatpush1.bf16.msra.mxu0 %v363
    %386 = vmatprep.subr.bf16.mxu0 0
    %387 = vmatpush1.bf16.msra.mxu0 %v364
    %388 = vmatprep.subr.bf16.mxu0 0
    %389 = vmatpush1.bf16.msra.mxu0 %v365
    %390 = vmatprep.subr.bf16.mxu0 0
    %391 = vmatpush1.bf16.msra.mxu0 0
    %392 = vmatprep.subr.bf16.mxu0 0
    %393 = vmatpush1.bf16.msra.mxu0 0
    %394 = vmatprep.subr.bf16.mxu0 0
    %395 = vmatpush1.bf16.msra.mxu0 0
    %396 = vmatprep.subr.bf16.mxu0 0
    %397 = vmatpush1.bf16.msra.mxu0 0
    %398 = vmatprep.subr.bf16.mxu0 0
    %399 = vmatpush1.bf16.msra.mxu0 0
    %400 = vmatprep.subr.bf16.mxu0 0
    %401 = vmatpush1.bf16.msra.mxu0 0
    %402 = vmatprep.subr.bf16.mxu0 0
    %403 = vmatpush1.bf16.msra.mxu0 0
    %404 = vmatprep.subr.bf16.mxu0 0
    %405 = vmatpush1.bf16.msra.mxu0 0
    %406 = vmatprep.mubr.bf16.mxu0 0
    %407 = vmatmul.mubr.bf16.gmra.mrb[0].mxu0 %v304
    %v408 = vpop.f32.mrb[0].mxu0
    %v409 = vadd.f32 %v325, %v408
    %v410 = vpop.f32.mrb[0].mxu0
    %v411 = vpop.f32.mrb[0].mxu0
    %v412 = vpop.f32.mrb[0].mxu0
    %413 = vdwg.mxu0
    %v414 = vmax.f32 %v409, 0.0
    %v415 = vpack.c.bf16 %v414, %v414
    %s416 = scalar_lea.vmem [#allocation7], 128
    %v417 = vld [vmem:[%s416] sm:$0xf]
    %v418 = vld [vmem:[%s416 + $0x4] sm:$0xf]
    %v419 = vld [vmem:[%s416 + $0x8] sm:$0xf]
    %v420 = vld [vmem:[%s416 + $0xc] sm:$0xf]
    %v421 = vld [vmem:[%s416 + $0x10] sm:$0xf]
    %v422 = vld [vmem:[%s416 + $0x14] sm:$0xf]
    %v423 = vld [vmem:[%s416 + $0x18] sm:$0xf]
    %v424 = vld [vmem:[%s416 + $0x1c] sm:$0xf]
    %v425 = vld [vmem:[%s416 + $0x20] sm:$0xf]
    %v426 = vld [vmem:[%s416 + $0x24] sm:$0xf]
    %v427 = vld [vmem:[%s416 + $0x28] sm:$0xf]
    %v428 = vld [vmem:[%s416 + $0x2c] sm:$0xf]
    %v429 = vld [vmem:[%s416 + $0x30] sm:$0xf]
    %v430 = vld [vmem:[%s416 + $0x34] sm:$0xf]
    %v431 = vld [vmem:[%s416 + $0x38] sm:$0xf]
    %v432 = vld [vmem:[%s416 + $0x3c] sm:$0xf]
    %v433 = vlaneseq
    %v434 = vshrl.u32 %v433, 7
    %v435 = vsub.s32 3, %v434
    %v436 = vrot.slane %v58, %v435
    %v453 = vunpack.c.l.b16 %v417
    %v454 = vunpack.c.l.b16 %v418
    %v455 = vunpack.c.l.b16 %v419
    %v456 = vunpack.c.l.b16 %v420
    %v457 = vunpack.c.l.b16 %v421
    %v458 = vunpack.c.l.b16 %v422
    %v459 = vunpack.c.l.b16 %v423
    %v460 = vunpack.c.l.b16 %v424
    %v461 = vunpack.c.l.b16 %v425
    %v462 = vunpack.c.l.b16 %v426
    %v463 = vunpack.c.l.b16 %v427
    %v464 = vunpack.c.l.b16 %v428
    %v465 = vunpack.c.l.b16 %v429
    %v466 = vunpack.c.l.b16 %v430
    %v467 = vunpack.c.l.b16 %v431
    %v468 = vunpack.c.l.b16 %v432
    %v469 = vpack.c.b16 %v454, %v453
    %v470 = vpack.c.b16 %v456, %v455
    %v471 = vpack.c.b16 %v458, %v457
    %v472 = vpack.c.b16 %v460, %v459
    %v473 = vpack.c.b16 %v462, %v461
    %v474 = vpack.c.b16 %v464, %v463
    %v475 = vpack.c.b16 %v466, %v465
    %v476 = vpack.c.b16 %v468, %v467
    %485 = vmatprep.subr.bf16.mxu0 0
    %486 = vmatpush1.bf16.msra.mxu0 %v469
    %487 = vmatprep.subr.bf16.mxu0 0
    %488 = vmatpush1.bf16.msra.mxu0 %v470
    %489 = vmatprep.subr.bf16.mxu0 0
    %490 = vmatpush1.bf16.msra.mxu0 %v471
    %491 = vmatprep.subr.bf16.mxu0 0
    %492 = vmatpush1.bf16.msra.mxu0 %v472
    %493 = vmatprep.subr.bf16.mxu0 0
    %494 = vmatpush1.bf16.msra.mxu0 %v473
    %495 = vmatprep.subr.bf16.mxu0 0
    %496 = vmatpush1.bf16.msra.mxu0 %v474
    %497 = vmatprep.subr.bf16.mxu0 0
    %498 = vmatpush1.bf16.msra.mxu0 %v475
    %499 = vmatprep.subr.bf16.mxu0 0
    %500 = vmatpush1.bf16.msra.mxu0 %v476
    %501 = vmatprep.subr.bf16.mxu0 0
    %502 = vmatpush1.bf16.msra.mxu0 0
    %503 = vmatprep.subr.bf16.mxu0 0
    %504 = vmatpush1.bf16.msra.mxu0 0
    %505 = vmatprep.subr.bf16.mxu0 0
    %506 = vmatpush1.bf16.msra.mxu0 0
    %507 = vmatprep.subr.bf16.mxu0 0
    %508 = vmatpush1.bf16.msra.mxu0 0
    %509 = vmatprep.subr.bf16.mxu0 0
    %510 = vmatpush1.bf16.msra.mxu0 0
    %511 = vmatprep.subr.bf16.mxu0 0
    %512 = vmatpush1.bf16.msra.mxu0 0
    %513 = vmatprep.subr.bf16.mxu0 0
    %514 = vmatpush1.bf16.msra.mxu0 0
    %515 = vmatprep.subr.bf16.mxu0 0
    %516 = vmatpush1.bf16.msra.mxu0 0
    %517 = vmatprep.mubr.bf16.mxu0 0
    %518 = vmatmul.mubr.bf16.gmra.mrb[0].mxu0 %v415
    %v519 = vpop.f32.mrb[0].mxu0
    %v520 = vadd.f32 %v436, %v519
    %v521 = vpop.f32.mrb[0].mxu0
    %v522 = vpop.f32.mrb[0].mxu0
    %v523 = vpop.f32.mrb[0].mxu0
    %524 = vdwg.mxu0
    %525 = vst [vmem:[#allocation8] sm:$0xf] %v520
    // Predicated region
    $region30: #{qnetwork_forward.1} parent=1 // pred_check
      _
    $region31: #{qnetwork_forward.1} parent=1 // pred_check_branch
      %527 = sbr.rel (0) target = $region33
    $region32: #{qnetwork_forward.1} parent=1 // pred_region
      %s529 = ssub.s32 64, 64
      %530 = vsyncadd [#allocation4], %s529
      %s532 = sshll.u32 [#allocation8], 4
      %s533 = int_to_ptr.vmem [resolvable:$true] %s532
      %535 = dma.vmem_to_hbm [thread:$0]  %s533, 64, %s4, [#allocation4]
    $region33: #{qnetwork_forward.1} parent=1 // pred_fallthru
      _
    // Predicated region
    $region34: #{qnetwork_forward.1} parent=1 // pred_check
      _
    $region35: #{qnetwork_forward.1} parent=1 // pred_check_branch
      %537 = sbr.rel (0) target = $region37
    $region36: #{qnetwork_forward.1} parent=1 // pred_region
      %538 = dma.done [#allocation4], 64
    $region37: #{qnetwork_forward.1} parent=1 // pred_fallthru
      _
    %539 = vsyncpa [#allocation3], 1
    %540 = vsyncpa [#allocation6], 1
    %541 = vsyncpa [#allocation4], 1

</llo_original>
